<compile_context>
chip_gen: v7x
topology: tpu7x:2x2x1
jax: 0.10.0
libtpu: 0.0.40
codegen_flags: <defaults>
</compile_context>

<pallas_src>
import functools

import jax
import jax.numpy as jnp
from jax.experimental import pallas as pl
from jax.experimental.pallas import tpu as pltpu

LANE = 128
NEG = -1e30  # "minus infinity" for padded logit lanes (finite -> no NaN downstream)


def _round_up(n, m):
    return ((n + m - 1) // m) * m


def _log_softmax(a):
    m = jnp.max(a, axis=-1, keepdims=True)
    s = a - m
    return s - jnp.log(jnp.sum(jnp.exp(s), axis=-1, keepdims=True))


def gpa_head_kernel(x_ref, z_ref,
                    wz_ref, bz_ref,            # merged [EmbedNet | prior] linear on z
                    w1e_ref, w1x_ref, b1_ref,  # FusionNet layer 1 (split at concat boundary)
                    w2_ref, b2_ref,            # FusionNet layer 2
                    ws_ref, bs_ref,            # per-output scale / bias (logical width)
                    out_ref, *, emb_p, compute_dtype):
    x = x_ref[...].astype(compute_dtype)
    z = z_ref[...].astype(compute_dtype)

    # Single merged matmul for everything that consumes z:
    #   zc[:, :emb_p] -> EmbedNet pre-activation, zc[:, emb_p:] -> prior logits.
    zc = jnp.dot(z, wz_ref[...], preferred_element_type=jnp.float32) + bz_ref[...]
    emb = jnp.maximum(zc[:, :emb_p], 0.0)          # EmbedNet (eval: knockout is a no-op)
    prior_logits = zc[:, emb_p:]                   # padded lanes are -1e30 via bz pad

    # FusionNet: Linear(emb_dim + dim -> hid) + ReLU + Linear(hid -> nb_Y)
    h = (jnp.dot(emb.astype(compute_dtype), w1e_ref[...],
                 preferred_element_type=jnp.float32)
         + jnp.dot(x, w1x_ref[...], preferred_element_type=jnp.float32)
         + b1_ref[...])
    h = jnp.maximum(h, 0.0)
    logits = (jnp.dot(h.astype(compute_dtype), w2_ref[...],
                      preferred_element_type=jnp.float32)
              + b2_ref[...])                       # padded lanes are -1e30 via b2 pad

    nb_y = out_ref.shape[1]                        # logical class count
    log_sum = _log_softmax(logits)[:, :nb_y] + _log_softmax(prior_logits)[:, :nb_y]
    out_ref[...] = log_sum * ws_ref[...] + bs_ref[...]


def prepare_params(p, compute_dtype=jnp.bfloat16):
    """Pad logical params to lane-dense shapes and cast matmul weights."""
    z_dim, emb_dim = p["we"].shape
    dim, hid = p["w1x"].shape
    nb_Y = p["w2"].shape[1]
    emb_p = _round_up(emb_dim, LANE)
    hid_p = _round_up(hid, LANE)
    nby_p = _round_up(nb_Y, LANE)

    def pad2(w, rows, cols, cval=0.0):
        return jnp.pad(w, ((0, rows - w.shape[0]), (0, cols - w.shape[1])),
                       constant_values=cval)

    # Merged z-weight: [EmbedNet we | prior wp] -> (z_dim, emb_p + nby_p)
    wz = jnp.concatenate([pad2(p["we"], z_dim, emb_p),
                          pad2(p["wp"], z_dim, nby_p)], axis=1).astype(compute_dtype)
    bz = jnp.concatenate([pad2(p["be"], 1, emb_p),
                          pad2(p["bp"], 1, nby_p, cval=NEG)],
                         axis=1).astype(jnp.float32)

    return {
        "wz": wz, "bz": bz,
        "w1e": pad2(p["w1e"], emb_p, hid_p).astype(compute_dtype),
        "w1x": pad2(p["w1x"], dim, hid_p).astype(compute_dtype),
        "b1": pad2(p["b1"], 1, hid_p).astype(jnp.float32),
        "w2": pad2(p["w2"], hid_p, nby_p).astype(compute_dtype),
        "b2": pad2(p["b2"], 1, nby_p, cval=NEG).astype(jnp.float32),
        "ws": p["ws"].astype(jnp.float32),   # kept at logical (1, nb_Y) width
        "bs": p["bs"].astype(jnp.float32),
    }


@functools.partial(jax.jit, static_argnames=("batch_tile", "compute_dtype"))
def gpa_head_forward(x, z, p, *, batch_tile=512, compute_dtype=jnp.bfloat16):
    B, dim = x.shape
    z_dim = z.shape[1]
    hid_p, nby_p = p["w2"].shape
    emb_p = p["wz"].shape[1] - nby_p
    nb_Y = p["ws"].shape[1]

    # Batch tiling: multiples of 8 (sublane), capped at `batch_tile`; pad B to
    # a whole number of tiles.  All blocks stay tiny vs VMEM, so large tiles
    # just amortize per-grid-step overhead.
    tb = min(batch_tile, _round_up(B, 8))
    b_pad = _round_up(B, tb)
    if b_pad != B:
        x = jnp.pad(x, ((0, b_pad - B), (0, 0)))
        z = jnp.pad(z, ((0, b_pad - B), (0, 0)))
    grid = (b_pad // tb,)

    def resident(arr):
        # Full-array block, constant index_map -> DMA'd once, stays in VMEM.
        return pl.BlockSpec(arr.shape, lambda i: (0,) * arr.ndim)

    in_specs = [
        pl.BlockSpec((tb, dim), lambda i: (i, 0)),
        pl.BlockSpec((tb, z_dim), lambda i: (i, 0)),
        resident(p["wz"]), resident(p["bz"]),
        resident(p["w1e"]), resident(p["w1x"]), resident(p["b1"]),
        resident(p["w2"]), resident(p["b2"]),
        resident(p["ws"]), resident(p["bs"]),
    ]
    # Output at logical class width: last dim == full array dim (BlockSpec rule
    # satisfied), 16x less HBM writeback than a 128-lane padded output.
    out_spec = pl.BlockSpec((tb, nb_Y), lambda i: (i, 0))

    flops = 2 * b_pad * (z_dim * (emb_p + nby_p) + emb_p * hid_p
                         + dim * hid_p + hid_p * nby_p)
    weight_bytes = sum(int(v.size) * v.dtype.itemsize for v in p.values())
    cost = pl.CostEstimate(
        flops=int(flops),
        transcendentals=int(2 * b_pad * nby_p),
        bytes_accessed=int(4 * b_pad * (dim + z_dim + nb_Y) + weight_bytes),
    )

    out = pl.pallas_call(
        functools.partial(gpa_head_kernel, emb_p=emb_p, compute_dtype=compute_dtype),
        out_shape=jax.ShapeDtypeStruct((b_pad, nb_Y), jnp.float32),
        grid=grid,
        in_specs=in_specs,
        out_specs=out_spec,
        compiler_params=pltpu.CompilerParams(
            dimension_semantics=("parallel",),   # megacore sharding on v7x
        ),
        cost_estimate=cost,
    )(x, z, p["wz"], p["bz"], p["w1e"], p["w1x"], p["b1"],
      p["w2"], p["b2"], p["ws"], p["bs"])
    return out[:B]


def init_params(key, dim, nb_Y, z_dim, emb_dim, hid):
    ks = jax.random.split(key, 8)

    def lin(k, fan_in, fan_out):
        scale = 1.0 / jnp.sqrt(jnp.float32(fan_in))
        return jax.random.uniform(k, (fan_in, fan_out), jnp.float32,
                                  minval=-scale, maxval=scale)

    # TODO(synk): EmbedNet internals / NaN-knockout for no_Z=True are unspecified
    # upstream; only the no_Z=False, prior='true_prior' eval path is implemented.
    return {
        "we": lin(ks[0], z_dim, emb_dim),          # EmbedNet
        "be": jnp.zeros((1, emb_dim), jnp.float32),
        "w1e": lin(ks[1], emb_dim, hid),           # FusionNet layer 1, [emb | input] split
        "w1x": lin(ks[2], dim, hid),
        "b1": jnp.zeros((1, hid), jnp.float32),
        "w2": lin(ks[3], hid, nb_Y),               # FusionNet layer 2
        "b2": jnp.zeros((1, nb_Y), jnp.float32),
        "wp": lin(ks[4], z_dim, nb_Y),             # prior net ('true_prior')
        "bp": jnp.zeros((1, nb_Y), jnp.float32),
        "ws": jnp.ones((1, nb_Y), jnp.float32),    # GPAHead ws / bs (ones / zeros)
        "bs": jnp.zeros((1, nb_Y), jnp.float32),
    }


def gpa_head_ref(x, z, p, compute_dtype=jnp.bfloat16):
    """Pure-JAX reference (mirrors the kernel's bf16 MXU-operand rounding)."""
    def mm(a, w):
        return jnp.dot(a.astype(compute_dtype), w.astype(compute_dtype),
                       preferred_element_type=jnp.float32)

    emb = jnp.maximum(mm(z, p["we"]) + p["be"], 0.0)
    h = jnp.maximum(mm(emb, p["w1e"]) + mm(x, p["w1x"]) + p["b1"], 0.0)
    logits = mm(h, p["w2"]) + p["b2"]
    log_ratio = jax.nn.log_softmax(logits, axis=-1)
    log_prior = jax.nn.log_softmax(mm(z, p["wp"]) + p["bp"], axis=-1)
    return (log_ratio + log_prior) * p["ws"] + p["bs"]


if __name__ == "__main__":
    # Small shapes consistent with the module:
    #   input: (B, dim), Z: (B, len(Zs)) float features, output: (B, nb_Y)
    B, dim, nb_Y = 8, 32, 8
    Zs = [3, 5, 4, 6]          # four Z variables
    z_dim = len(Zs)
    emb_dim = 16               # EmbedNet.dim()
    hid = 100                  # FusionNet hid_size=100

    key = jax.random.PRNGKey(0)
    k_x, k_z, k_p = jax.random.split(key, 3)
    x = jax.random.normal(k_x, (B, dim), jnp.float32)
    z = jax.random.normal(k_z, (B, z_dim), jnp.float32)

    params = init_params(k_p, dim, nb_Y, z_dim, emb_dim, hid)
    padded = prepare_params(params)                 # lane-dense, bf16 matmul weights

    out = jax.block_until_ready(gpa_head_forward(x, z, padded))
    ref = gpa_head_ref(x, z, params)
    assert out.shape == (B, nb_Y)
    assert bool(jnp.isfinite(out).all()), "non-finite output"
    assert bool(jnp.allclose(out, ref, rtol=1e-4, atol=1e-4)), "mismatch vs reference"

    # Exercise the multi-step grid + batch-padding path as well.
    B2 = 300
    x2 = jax.random.normal(jax.random.PRNGKey(1), (B2, dim), jnp.float32)
    z2 = jax.random.normal(jax.random.PRNGKey(2), (B2, z_dim), jnp.float32)
    out2 = jax.block_until_ready(gpa_head_forward(x2, z2, padded, batch_tile=128))
    ref2 = gpa_head_ref(x2, z2, params)
    assert out2.shape == (B2, nb_Y)
    assert bool(jnp.isfinite(out2).all()), "non-finite output (tiled)"
    assert bool(jnp.allclose(out2, ref2, rtol=1e-4, atol=1e-4)), "mismatch (tiled)"

    print("KERNEL_OK")
</pallas_src>

<mosaic_0001>
module attributes {stable_mosaic.version = 11 : i64} {
  func.func @gpa_head_kernel(%arg0: i32, %arg1: memref<8x32xf32, #tpu.memory_space<vmem>>, %arg2: memref<8x4xf32, #tpu.memory_space<vmem>>, %arg3: memref<4x256xbf16, #tpu.memory_space<vmem>>, %arg4: memref<1x256xf32, #tpu.memory_space<vmem>>, %arg5: memref<128x128xbf16, #tpu.memory_space<vmem>>, %arg6: memref<32x128xbf16, #tpu.memory_space<vmem>>, %arg7: memref<1x128xf32, #tpu.memory_space<vmem>>, %arg8: memref<128x128xbf16, #tpu.memory_space<vmem>>, %arg9: memref<1x128xf32, #tpu.memory_space<vmem>>, %arg10: memref<1x8xf32, #tpu.memory_space<vmem>>, %arg11: memref<1x8xf32, #tpu.memory_space<vmem>>, %arg12: memref<8x8xf32, #tpu.memory_space<vmem>>) attributes {dimension_semantics = [#tpu.dimension_semantics<parallel>], iteration_bounds = array<i64: 1>, scalar_prefetch = 0 : i64, scratch_operands = 0 : i64, tpu.core_type = #tpu.core_type<tc>, window_params = [{transform_indices = @transform_0, window_bounds = array<i64: 8, 32>}, {transform_indices = @transform_1, window_bounds = array<i64: 8, 4>}, {pipeline_mode = #tpu.pipeline_mode<synchronous>, transform_indices = @transform_2, window_bounds = array<i64: 4, 256>}, {pipeline_mode = #tpu.pipeline_mode<synchronous>, transform_indices = @transform_3, window_bounds = array<i64: 1, 256>}, {pipeline_mode = #tpu.pipeline_mode<synchronous>, transform_indices = @transform_4, window_bounds = array<i64: 128, 128>}, {pipeline_mode = #tpu.pipeline_mode<synchronous>, transform_indices = @transform_5, window_bounds = array<i64: 32, 128>}, {pipeline_mode = #tpu.pipeline_mode<synchronous>, transform_indices = @transform_6, window_bounds = array<i64: 1, 128>}, {pipeline_mode = #tpu.pipeline_mode<synchronous>, transform_indices = @transform_7, window_bounds = array<i64: 128, 128>}, {pipeline_mode = #tpu.pipeline_mode<synchronous>, transform_indices = @transform_8, window_bounds = array<i64: 1, 128>}, {pipeline_mode = #tpu.pipeline_mode<synchronous>, transform_indices = @transform_9, window_bounds = array<i64: 1, 8>}, {pipeline_mode = #tpu.pipeline_mode<synchronous>, transform_indices = @transform_10, window_bounds = array<i64: 1, 8>}, {transform_indices = @transform_11, window_bounds = array<i64: 8, 8>}]} {
    %c0 = arith.constant 0 : index
    %c0_0 = arith.constant 0 : index
    %0 = vector.load %arg1[%c0, %c0_0] : memref<8x32xf32, #tpu.memory_space<vmem>>, vector<8x32xf32>
    %1 = arith.truncf %0 : vector<8x32xf32> to vector<8x32xbf16>
    %c0_1 = arith.constant 0 : index
    %c0_2 = arith.constant 0 : index
    %2 = vector.load %arg2[%c0_1, %c0_2] : memref<8x4xf32, #tpu.memory_space<vmem>>, vector<8x4xf32>
    %3 = arith.truncf %2 : vector<8x4xf32> to vector<8x4xbf16>
    %c0_3 = arith.constant 0 : index
    %c0_4 = arith.constant 0 : index
    %4 = vector.load %arg3[%c0_3, %c0_4] : memref<4x256xbf16, #tpu.memory_space<vmem>>, vector<4x256xbf16>
    %cst = arith.constant dense<0.000000e+00> : vector<8x256xf32>
    %5 = tpu.matmul %3, %4, %cst {dimension_numbers = #tpu.dot_dimension_numbers<[1], [0], [0], [1], [0, 0, 1, 1], [], []>} : vector<8x4xbf16>, vector<4x256xbf16>, vector<8x256xf32> -> vector<8x256xf32>
    %c0_5 = arith.constant 0 : index
    %c0_6 = arith.constant 0 : index
    %6 = vector.load %arg4[%c0_5, %c0_6] : memref<1x256xf32, #tpu.memory_space<vmem>>, vector<1x256xf32>
    %7 = vector.broadcast %6 : vector<1x256xf32> to vector<8x256xf32>
    %8 = arith.addf %5, %7 : vector<8x256xf32>
    %9 = vector.extract_strided_slice %8 {offsets = [0, 0], sizes = [8, 128], strides = [1, 1]} : vector<8x256xf32> to vector<8x128xf32>
    %cst_7 = arith.constant 0.000000e+00 : f32
    %10 = vector.broadcast %cst_7 : f32 to vector<8x128xf32>
    %11 = arith.maximumf %9, %10 : vector<8x128xf32>
    %12 = vector.extract_strided_slice %8 {offsets = [0, 128], sizes = [8, 128], strides = [1, 1]} : vector<8x256xf32> to vector<8x128xf32>
    %13 = arith.truncf %11 : vector<8x128xf32> to vector<8x128xbf16>
    %c0_8 = arith.constant 0 : index
    %c0_9 = arith.constant 0 : index
    %14 = vector.load %arg5[%c0_8, %c0_9] : memref<128x128xbf16, #tpu.memory_space<vmem>>, vector<128x128xbf16>
    %cst_10 = arith.constant dense<0.000000e+00> : vector<8x128xf32>
    %15 = tpu.matmul %13, %14, %cst_10 {dimension_numbers = #tpu.dot_dimension_numbers<[1], [0], [0], [1], [0, 0, 1, 1], [], []>} : vector<8x128xbf16>, vector<128x128xbf16>, vector<8x128xf32> -> vector<8x128xf32>
    %c0_11 = arith.constant 0 : index
    %c0_12 = arith.constant 0 : index
    %16 = vector.load %arg6[%c0_11, %c0_12] : memref<32x128xbf16, #tpu.memory_space<vmem>>, vector<32x128xbf16>
    %cst_13 = arith.constant dense<0.000000e+00> : vector<8x128xf32>
    %17 = tpu.matmul %1, %16, %cst_13 {dimension_numbers = #tpu.dot_dimension_numbers<[1], [0], [0], [1], [0, 0, 1, 1], [], []>} : vector<8x32xbf16>, vector<32x128xbf16>, vector<8x128xf32> -> vector<8x128xf32>
    %18 = arith.addf %15, %17 : vector<8x128xf32>
    %c0_14 = arith.constant 0 : index
    %c0_15 = arith.constant 0 : index
    %19 = vector.load %arg7[%c0_14, %c0_15] : memref<1x128xf32, #tpu.memory_space<vmem>>, vector<1x128xf32>
    %20 = vector.broadcast %19 : vector<1x128xf32> to vector<8x128xf32>
    %21 = arith.addf %18, %20 : vector<8x128xf32>
    %cst_16 = arith.constant 0.000000e+00 : f32
    %22 = vector.broadcast %cst_16 : f32 to vector<8x128xf32>
    %23 = arith.maximumf %21, %22 : vector<8x128xf32>
    %24 = arith.truncf %23 : vector<8x128xf32> to vector<8x128xbf16>
    %c0_17 = arith.constant 0 : index
    %c0_18 = arith.constant 0 : index
    %25 = vector.load %arg8[%c0_17, %c0_18] : memref<128x128xbf16, #tpu.memory_space<vmem>>, vector<128x128xbf16>
    %cst_19 = arith.constant dense<0.000000e+00> : vector<8x128xf32>
    %26 = tpu.matmul %24, %25, %cst_19 {dimension_numbers = #tpu.dot_dimension_numbers<[1], [0], [0], [1], [0, 0, 1, 1], [], []>} : vector<8x128xbf16>, vector<128x128xbf16>, vector<8x128xf32> -> vector<8x128xf32>
    %c0_20 = arith.constant 0 : index
    %c0_21 = arith.constant 0 : index
    %27 = vector.load %arg9[%c0_20, %c0_21] : memref<1x128xf32, #tpu.memory_space<vmem>>, vector<1x128xf32>
    %28 = vector.broadcast %27 : vector<1x128xf32> to vector<8x128xf32>
    %29 = arith.addf %26, %28 : vector<8x128xf32>
    %cst_22 = arith.constant dense<0xFF800000> : vector<8xf32>
    %30 = vector.multi_reduction <maximumf>, %29, %cst_22 [1] : vector<8x128xf32> to vector<8xf32>
    %31 = vector.shape_cast %30 : vector<8xf32> to vector<8x1xf32>
    %32 = vector.broadcast %31 : vector<8x1xf32> to vector<8x128xf32>
    %33 = arith.subf %29, %32 : vector<8x128xf32>
    %34 = math.exp %33 : vector<8x128xf32>
    %cst_23 = arith.constant dense<0.000000e+00> : vector<8xf32>
    %35 = vector.multi_reduction <add>, %34, %cst_23 [1] : vector<8x128xf32> to vector<8xf32>
    %36 = vector.shape_cast %35 : vector<8xf32> to vector<8x1xf32>
    %37 = math.log %36 : vector<8x1xf32>
    %38 = vector.broadcast %37 : vector<8x1xf32> to vector<8x128xf32>
    %39 = arith.subf %33, %38 : vector<8x128xf32>
    %40 = vector.extract_strided_slice %39 {offsets = [0, 0], sizes = [8, 8], strides = [1, 1]} : vector<8x128xf32> to vector<8x8xf32>
    %cst_24 = arith.constant dense<0xFF800000> : vector<8xf32>
    %41 = vector.multi_reduction <maximumf>, %12, %cst_24 [1] : vector<8x128xf32> to vector<8xf32>
    %42 = vector.shape_cast %41 : vector<8xf32> to vector<8x1xf32>
    %43 = vector.broadcast %42 : vector<8x1xf32> to vector<8x128xf32>
    %44 = arith.subf %12, %43 : vector<8x128xf32>
    %45 = math.exp %44 : vector<8x128xf32>
    %cst_25 = arith.constant dense<0.000000e+00> : vector<8xf32>
    %46 = vector.multi_reduction <add>, %45, %cst_25 [1] : vector<8x128xf32> to vector<8xf32>
    %47 = vector.shape_cast %46 : vector<8xf32> to vector<8x1xf32>
    %48 = math.log %47 : vector<8x1xf32>
    %49 = vector.broadcast %48 : vector<8x1xf32> to vector<8x128xf32>
    %50 = arith.subf %44, %49 : vector<8x128xf32>
    %51 = vector.extract_strided_slice %50 {offsets = [0, 0], sizes = [8, 8], strides = [1, 1]} : vector<8x128xf32> to vector<8x8xf32>
    %52 = arith.addf %40, %51 : vector<8x8xf32>
    %c0_26 = arith.constant 0 : index
    %c0_27 = arith.constant 0 : index
    %53 = vector.load %arg10[%c0_26, %c0_27] : memref<1x8xf32, #tpu.memory_space<vmem>>, vector<1x8xf32>
    %54 = vector.broadcast %53 : vector<1x8xf32> to vector<8x8xf32>
    %55 = arith.mulf %52, %54 : vector<8x8xf32>
    %c0_28 = arith.constant 0 : index
    %c0_29 = arith.constant 0 : index
    %56 = vector.load %arg11[%c0_28, %c0_29] : memref<1x8xf32, #tpu.memory_space<vmem>>, vector<1x8xf32>
    %57 = vector.broadcast %56 : vector<1x8xf32> to vector<8x8xf32>
    %58 = arith.addf %55, %57 : vector<8x8xf32>
    %c0_30 = arith.constant 0 : index
    %c0_31 = arith.constant 0 : index
    %59 = vector.load %arg12[%c0_30, %c0_31] : memref<8x8xf32, #tpu.memory_space<vmem>>, vector<8x8xf32>
    tpu.vector_store %arg12[%c0_30, %c0_31], %58 {strides = array<i32>} : memref<8x8xf32, #tpu.memory_space<vmem>>, vector<8x8xf32>,
    return
  }
  func.func @transform_0(%arg0: i32) -> (i32, i32) {
    %c0_i32 = arith.constant 0 : i32
    %c0_i32_0 = arith.constant 0 : i32
    return %arg0, %c0_i32 : i32, i32
  }
  func.func @transform_1(%arg0: i32) -> (i32, i32) {
    %c0_i32 = arith.constant 0 : i32
    %c0_i32_0 = arith.constant 0 : i32
    return %arg0, %c0_i32 : i32, i32
  }
  func.func @transform_2(%arg0: i32) -> (i32, i32) {
    %c0_i32 = arith.constant 0 : i32
    %c0_i32_0 = arith.constant 0 : i32
    %c0_i32_1 = arith.constant 0 : i32
    return %c0_i32, %c0_i32_0 : i32, i32
  }
  func.func @transform_3(%arg0: i32) -> (i32, i32) {
    %c0_i32 = arith.constant 0 : i32
    %c0_i32_0 = arith.constant 0 : i32
    %c0_i32_1 = arith.constant 0 : i32
    return %c0_i32, %c0_i32_0 : i32, i32
  }
  func.func @transform_4(%arg0: i32) -> (i32, i32) {
    %c0_i32 = arith.constant 0 : i32
    %c0_i32_0 = arith.constant 0 : i32
    %c0_i32_1 = arith.constant 0 : i32
    return %c0_i32, %c0_i32_0 : i32, i32
  }
  func.func @transform_5(%arg0: i32) -> (i32, i32) {
    %c0_i32 = arith.constant 0 : i32
    %c0_i32_0 = arith.constant 0 : i32
    %c0_i32_1 = arith.constant 0 : i32
    return %c0_i32, %c0_i32_0 : i32, i32
  }
  func.func @transform_6(%arg0: i32) -> (i32, i32) {
    %c0_i32 = arith.constant 0 : i32
    %c0_i32_0 = arith.constant 0 : i32
    %c0_i32_1 = arith.constant 0 : i32
    return %c0_i32, %c0_i32_0 : i32, i32
  }
  func.func @transform_7(%arg0: i32) -> (i32, i32) {
    %c0_i32 = arith.constant 0 : i32
    %c0_i32_0 = arith.constant 0 : i32
    %c0_i32_1 = arith.constant 0 : i32
    return %c0_i32, %c0_i32_0 : i32, i32
  }
  func.func @transform_8(%arg0: i32) -> (i32, i32) {
    %c0_i32 = arith.constant 0 : i32
    %c0_i32_0 = arith.constant 0 : i32
    %c0_i32_1 = arith.constant 0 : i32
    return %c0_i32, %c0_i32_0 : i32, i32
  }
  func.func @transform_9(%arg0: i32) -> (i32, i32) {
    %c0_i32 = arith.constant 0 : i32
    %c0_i32_0 = arith.constant 0 : i32
    %c0_i32_1 = arith.constant 0 : i32
    return %c0_i32, %c0_i32_0 : i32, i32
  }
  func.func @transform_10(%arg0: i32) -> (i32, i32) {
    %c0_i32 = arith.constant 0 : i32
    %c0_i32_0 = arith.constant 0 : i32
    %c0_i32_1 = arith.constant 0 : i32
    return %c0_i32, %c0_i32_0 : i32, i32
  }
  func.func @transform_11(%arg0: i32) -> (i32, i32) {
    %c0_i32 = arith.constant 0 : i32
    %c0_i32_0 = arith.constant 0 : i32
    return %arg0, %c0_i32 : i32, i32
  }
}

</mosaic_0001>

<llo_original>
// kernel: gpa_head_forward.1
$region0: #{gpa_head_forward.1}
  #allocation0 [shape = 'u32[]', space=smem, size = 0x4, offset = 0x4, fixed_abs, tag = 'smem constant byte address 0x4 - core index']
  #allocation1 [shape = 'u32[144,128]{1,0:T(1,128)}', space=vmem, size = 0x12000, scoped, tag = 'internal scratch']
  %s0 = inlined_call_operand.vmem [shape: f32[8,32], index: 0, kind: input, shape index: {}]
  %s1 = inlined_call_operand.vmem [shape: f32[8,4], index: 1, kind: input, shape index: {}]
  %s2 = inlined_call_operand.vmem [shape: bf16[4,256], index: 2, kind: input, shape index: {}]
  %s3 = inlined_call_operand.vmem [shape: f32[1,256], index: 3, kind: input, shape index: {}]
  %s4 = inlined_call_operand.hbm [shape: bf16[128,128], index: 4, kind: input, shape index: {}]
  %s5 = inlined_call_operand.vmem [shape: bf16[32,128], index: 5, kind: input, shape index: {}]
  %s6 = inlined_call_operand.hbm [shape: f32[1,128], index: 6, kind: input, shape index: {}]
  %s7 = inlined_call_operand.hbm [shape: bf16[128,128], index: 7, kind: input, shape index: {}]
  %s8 = inlined_call_operand.hbm [shape: f32[1,128], index: 8, kind: input, shape index: {}]
  %s9 = inlined_call_operand.vmem [shape: f32[1,8], index: 9, kind: input, shape index: {}]
  %s10 = inlined_call_operand.hbm [shape: f32[1,8], index: 10, kind: input, shape index: {}]
  %s11 = inlined_call_operand.hbm [shape: f32[8,8], index: 11, kind: output, shape index: {}]
  %s12 = sld [smem:[#allocation0]]
  $region74: #{gpa_head_forward.1} parent=0
    _
  %s14 = ssub.s32 1, %s12
  %s15 = scalar_select 0, %s14, %s12
  $region1: #{gpa_head_forward.1} parent=0
    #allocation2 [shape = 'u8[32768]{0}', space=vmem, size = 0x8000, scoped, tag = 'input window, operand 4, single buffered']
    #allocation3 [shape = 's32[1]{0}', space=sflag, size = 0x4, scoped, tag = 'scoped memory for gpa_head_forward.1']
    #allocation4 [shape = 's32[1]{0}', space=sflag, size = 0x4, scoped, tag = 'scoped memory for gpa_head_forward.1']
    #allocation5 [shape = 'u8[512]{0}', space=vmem, size = 0x400, scoped, tag = 'input window, operand 6, single buffered']
    #allocation6 [shape = 's32[1]{0}', space=sflag, size = 0x4, scoped, tag = 'scoped memory for gpa_head_forward.1']
    #allocation7 [shape = 'u8[32768]{0}', space=vmem, size = 0x8000, scoped, tag = 'input window, operand 7, single buffered']
    #allocation8 [shape = 'u8[512]{0}', space=vmem, size = 0x400, scoped, tag = 'input window, operand 8, single buffered']
    #allocation9 [shape = 's32[1]{0}', space=sflag, size = 0x4, scoped, tag = 'scoped memory for gpa_head_forward.1']
    #allocation10 [shape = 'u8[512]{0}', space=vmem, size = 0x400, scoped, tag = 'input window, operand 10, single buffered']
    #allocation11 [shape = 'u8[4096]{0}', space=vmem, size = 0x1000, scoped, tag = 'output window, operand 0, single buffered']
    %16 = vsyncpa [#allocation3], 0
    %17 = vsyncpa [#allocation6], 0
    %18 = vsyncpa [#allocation9], 0
    %19 = vsyncpa [#allocation4], 0
    // Predicated region
    $region2: #{gpa_head_forward.1} parent=1 // pred_check
      _
    $region3: #{gpa_head_forward.1} parent=1 // pred_check_branch
      %21 = sbr.rel (0) target = $region5
    $region4: #{gpa_head_forward.1} parent=1 // pred_region
      _
    $region5: #{gpa_head_forward.1} parent=1 // pred_fallthru
      _
    // Predicated region
    $region6: #{gpa_head_forward.1} parent=1 // pred_check
      _
    $region7: #{gpa_head_forward.1} parent=1 // pred_check_branch
      %23 = sbr.rel (0) target = $region9
    $region8: #{gpa_head_forward.1} parent=1 // pred_region
      _
    $region9: #{gpa_head_forward.1} parent=1 // pred_fallthru
      _
    // Predicated region
    $region10: #{gpa_head_forward.1} parent=1 // pred_check
      _
    $region11: #{gpa_head_forward.1} parent=1 // pred_check_branch
      %25 = sbr.rel (0) target = $region13
    $region12: #{gpa_head_forward.1} parent=1 // pred_region
      _
    $region13: #{gpa_head_forward.1} parent=1 // pred_fallthru
      _
    // Predicated region
    $region14: #{gpa_head_forward.1} parent=1 // pred_check
      _
    $region15: #{gpa_head_forward.1} parent=1 // pred_check_branch
      %27 = sbr.rel (0) target = $region17
    $region16: #{gpa_head_forward.1} parent=1 // pred_region
      _
    $region17: #{gpa_head_forward.1} parent=1 // pred_fallthru
      _
    // Predicated region
    $region18: #{gpa_head_forward.1} parent=1 // pred_check
      _
    $region19: #{gpa_head_forward.1} parent=1 // pred_check_branch
      %29 = sbr.rel (0) target = $region21
    $region20: #{gpa_head_forward.1} parent=1 // pred_region
      %s31 = ssub.s32 1024, 1024
      %32 = vsyncadd [#allocation3], %s31
      %s33 = sshll.u32 [#allocation2], 4
      %s34 = int_to_ptr.vmem [resolvable:$true] %s33
      %39 = dma.hbm_to_vmem [thread:$0]  %s4, 1024, %s34, [#allocation3], 64, 64, 4
    $region21: #{gpa_head_forward.1} parent=1 // pred_fallthru
      _
    // Predicated region
    $region22: #{gpa_head_forward.1} parent=1 // pred_check
      _
    $region23: #{gpa_head_forward.1} parent=1 // pred_check_branch
      %41 = sbr.rel (0) target = $region25
    $region24: #{gpa_head_forward.1} parent=1 // pred_region
      _
    $region25: #{gpa_head_forward.1} parent=1 // pred_fallthru
      _
    // Predicated region
    $region26: #{gpa_head_forward.1} parent=1 // pred_check
      _
    $region27: #{gpa_head_forward.1} parent=1 // pred_check_branch
      %43 = sbr.rel (0) target = $region29
    $region28: #{gpa_head_forward.1} parent=1 // pred_region
      %s45 = ssub.s32 16, 16
      %46 = vsyncadd [#allocation6], %s45
      %s48 = sshll.u32 [#allocation5], 4
      %s49 = int_to_ptr.vmem [resolvable:$true] %s48
      %51 = dma.hbm_to_vmem [thread:$0]  %s6, 16, %s49, [#allocation6]
    $region29: #{gpa_head_forward.1} parent=1 // pred_fallthru
      _
    // Predicated region
    $region30: #{gpa_head_forward.1} parent=1 // pred_check
      _
    $region31: #{gpa_head_forward.1} parent=1 // pred_check_branch
      %53 = sbr.rel (0) target = $region33
    $region32: #{gpa_head_forward.1} parent=1 // pred_region
      %s55 = ssub.s32 1024, 1024
      %56 = vsyncadd [#allocation6], %s55
      %s57 = sshll.u32 [#allocation7], 4
      %s58 = int_to_ptr.vmem [resolvable:$true] %s57
      %63 = dma.hbm_to_vmem [thread:$0]  %s7, 1024, %s58, [#allocation6], 64, 64, 4
    $region33: #{gpa_head_forward.1} parent=1 // pred_fallthru
      _
    // Predicated region
    $region34: #{gpa_head_forward.1} parent=1 // pred_check
      _
    $region35: #{gpa_head_forward.1} parent=1 // pred_check_branch
      %65 = sbr.rel (0) target = $region37
    $region36: #{gpa_head_forward.1} parent=1 // pred_region
      %s67 = ssub.s32 16, 16
      %68 = vsyncadd [#allocation9], %s67
      %s70 = sshll.u32 [#allocation8], 4
      %s71 = int_to_ptr.vmem [resolvable:$true] %s70
      %73 = dma.hbm_to_vmem [thread:$0]  %s8, 16, %s71, [#allocation9]
    $region37: #{gpa_head_forward.1} parent=1 // pred_fallthru
      _
    // Predicated region
    $region38: #{gpa_head_forward.1} parent=1 // pred_check
      _
    $region39: #{gpa_head_forward.1} parent=1 // pred_check_branch
      %75 = sbr.rel (0) target = $region41
    $region40: #{gpa_head_forward.1} parent=1 // pred_region
      _
    $region41: #{gpa_head_forward.1} parent=1 // pred_fallthru
      _
    // Predicated region
    $region42: #{gpa_head_forward.1} parent=1 // pred_check
      _
    $region43: #{gpa_head_forward.1} parent=1 // pred_check_branch
      %77 = sbr.rel (0) target = $region45
    $region44: #{gpa_head_forward.1} parent=1 // pred_region
      %s79 = ssub.s32 16, 16
      %80 = vsyncadd [#allocation9], %s79
      %s82 = sshll.u32 [#allocation10], 4
      %s83 = int_to_ptr.vmem [resolvable:$true] %s82
      %85 = dma.hbm_to_vmem [thread:$0]  %s10, 16, %s83, [#allocation9]
    $region45: #{gpa_head_forward.1} parent=1 // pred_fallthru
      _
    // Predicated region
    $region46: #{gpa_head_forward.1} parent=1 // pred_check
      _
    $region47: #{gpa_head_forward.1} parent=1 // pred_check_branch
      %87 = sbr.rel (0) target = $region49
    $region48: #{gpa_head_forward.1} parent=1 // pred_region
      %88 = dma.done [#allocation3], 1024
    $region49: #{gpa_head_forward.1} parent=1 // pred_fallthru
      _
    // Predicated region
    $region50: #{gpa_head_forward.1} parent=1 // pred_check
      _
    $region51: #{gpa_head_forward.1} parent=1 // pred_check_branch
      %90 = sbr.rel (0) target = $region53
    $region52: #{gpa_head_forward.1} parent=1 // pred_region
      %91 = dma.done [#allocation6], 16
    $region53: #{gpa_head_forward.1} parent=1 // pred_fallthru
      _
    // Predicated region
    $region54: #{gpa_head_forward.1} parent=1 // pred_check
      _
    $region55: #{gpa_head_forward.1} parent=1 // pred_check_branch
      %93 = sbr.rel (0) target = $region57
    $region56: #{gpa_head_forward.1} parent=1 // pred_region
      %94 = dma.done [#allocation6], 1024
    $region57: #{gpa_head_forward.1} parent=1 // pred_fallthru
      _
    // Predicated region
    $region58: #{gpa_head_forward.1} parent=1 // pred_check
      _
    $region59: #{gpa_head_forward.1} parent=1 // pred_check_branch
      %96 = sbr.rel (0) target = $region61
    $region60: #{gpa_head_forward.1} parent=1 // pred_region
      %97 = dma.done [#allocation9], 16
    $region61: #{gpa_head_forward.1} parent=1 // pred_fallthru
      _
    // Predicated region
    $region62: #{gpa_head_forward.1} parent=1 // pred_check
      _
    $region63: #{gpa_head_forward.1} parent=1 // pred_check_branch
      %99 = sbr.rel (0) target = $region65
    $region64: #{gpa_head_forward.1} parent=1 // pred_region
      %100 = dma.done [#allocation9], 16
    $region65: #{gpa_head_forward.1} parent=1 // pred_fallthru
      _
    %v102 = vld [vmem:[%s0] sm:$0xff]
    %v103 = vpack.c.bf16 %v102, %v102
    %v104 = vld [vmem:[%s1] sm:$0xff]
    %v105 = vpack.c.bf16 %v104, %v104
    %v106 = vld [vmem:[%s2] sm:$0xf]
    %v107 = vld [vmem:[%s3] sm:$0x3]
    %v109 = vlaneseq
    %v110 = vshrl.u32 %v109, 7
    %v111 = vsub.s32 0, %v110
    %v112 = vrot.slane %v107, %v111
    %v113 = vlaneseq
    %v114 = vshrl.u32 %v113, 7
    %v115 = vsub.s32 1, %v114
    %v116 = vrot.slane %v107, %v115
    %v121 = vunpack.c.l.s4 1983009808
    %v122 = vunpack.c.0.s8 %v121
    %v123 = vlaneseq
    %v124 = vshrl.u32 %v123, 7
    %v125 = vsub.s32 %v122, %v124
    %v126 = vrot.slane %v106, %v125
    %v127 = vcombine.high %v126, %v126
    %vm128 = vcmask 31744
    %v130 = vsel %vm128, %v105, 0
    %vm132 = vcmask 1041408
    %v134 = vsel %vm132, %v126, 0
    %v137 = vsel %vm132, %v127, 0
    %139 = vmatprep.subr.bf16.mxu0 %v137
    %140 = vmatpush1.bf16.msra.mxu0 %v134
    %141 = vmatprep.subr.bf16.mxu0 0
    %142 = vmatpush1.bf16.msra.mxu0 0
    %143 = vmatprep.subr.bf16.mxu0 0
    %144 = vmatpush1.bf16.msra.mxu0 0
    %145 = vmatprep.subr.bf16.mxu0 0
    %146 = vmatpush1.bf16.msra.mxu0 0
    %147 = vmatprep.subr.bf16.mxu0 0
    %148 = vmatpush1.bf16.msra.mxu0 0
    %149 = vmatprep.subr.bf16.mxu0 0
    %150 = vmatpush1.bf16.msra.mxu0 0
    %151 = vmatprep.subr.bf16.mxu0 0
    %152 = vmatpush1.bf16.msra.mxu0 0
    %153 = vmatprep.subr.bf16.mxu0 0
    %154 = vmatpush1.bf16.msra.mxu0 0
    %155 = vmatprep.subr.bf16.mxu0 0
    %156 = vmatpush1.bf16.msra.mxu0 0
    %157 = vmatprep.subr.bf16.mxu0 0
    %158 = vmatpush1.bf16.msra.mxu0 0
    %159 = vmatprep.subr.bf16.mxu0 0
    %160 = vmatpush1.bf16.msra.mxu0 0
    %161 = vmatprep.subr.bf16.mxu0 0
    %162 = vmatpush1.bf16.msra.mxu0 0
    %163 = vmatprep.subr.bf16.mxu0 0
    %164 = vmatpush1.bf16.msra.mxu0 0
    %165 = vmatprep.subr.bf16.mxu0 0
    %166 = vmatpush1.bf16.msra.mxu0 0
    %167 = vmatprep.subr.bf16.mxu0 0
    %168 = vmatpush1.bf16.msra.mxu0 0
    %169 = vmatprep.subr.bf16.mxu0 0
    %170 = vmatpush1.bf16.msra.mxu0 0
    %171 = vmatprep.mubr.bf16.mxu0 0
    %172 = vmatmul.mubr.bf16.gmra.mrb[0].mxu0 %v130
    %v173 = vpop.f32.mrb[0].mxu0
    %v174 = vadd.f32 %v112, %v173
    %v175 = vpop.f32.mrb[0].mxu0
    %v176 = vadd.f32 %v116, %v175
    %v177 = vpop.f32.mrb[0].mxu0
    %v178 = vpop.f32.mrb[0].mxu0
    %179 = vdwg.mxu0
    %v180 = vmax.f32 %v174, 0.0
    %v181 = vpack.c.bf16 %v180, %v180
    %v182 = vld [vmem:[#allocation2] sm:$0xf]
    %v183 = vld [vmem:[#allocation2 + $0x4] sm:$0xf]
    %v184 = vld [vmem:[#allocation2 + $0x8] sm:$0xf]
    %v185 = vld [vmem:[#allocation2 + $0xc] sm:$0xf]
    %v186 = vld [vmem:[#allocation2 + $0x10] sm:$0xf]
    %v187 = vld [vmem:[#allocation2 + $0x14] sm:$0xf]
    %v188 = vld [vmem:[#allocation2 + $0x18] sm:$0xf]
    %v189 = vld [vmem:[#allocation2 + $0x1c] sm:$0xf]
    %v190 = vld [vmem:[#allocation2 + $0x20] sm:$0xf]
    %v191 = vld [vmem:[#allocation2 + $0x24] sm:$0xf]
    %v192 = vld [vmem:[#allocation2 + $0x28] sm:$0xf]
    %v193 = vld [vmem:[#allocation2 + $0x2c] sm:$0xf]
    %v194 = vld [vmem:[#allocation2 + $0x30] sm:$0xf]
    %v195 = vld [vmem:[#allocation2 + $0x34] sm:$0xf]
    %v196 = vld [vmem:[#allocation2 + $0x38] sm:$0xf]
    %v197 = vld [vmem:[#allocation2 + $0x3c] sm:$0xf]
    %v198 = vld [vmem:[%s5] sm:$0xf]
    %v199 = vld [vmem:[%s5 + $0x4] sm:$0xf]
    %v200 = vld [vmem:[%s5 + $0x8] sm:$0xf]
    %v201 = vld [vmem:[%s5 + $0xc] sm:$0xf]
    %v206 = vunpack.c.l.b16 %v198
    %v207 = vunpack.c.l.b16 %v199
    %v208 = vunpack.c.l.b16 %v200
    %v209 = vunpack.c.l.b16 %v201
    %v210 = vpack.c.b16 %v207, %v206
    %v211 = vpack.c.b16 %v209, %v208
    %vm214 = vcmask 261120
    %v216 = vsel %vm214, %v103, 0
    %218 = vmatprep.subr.bf16.mxu0 0
    %219 = vmatpush1.bf16.msra.mxu0 %v210
    %220 = vmatprep.subr.bf16.mxu0 0
    %221 = vmatpush1.bf16.msra.mxu0 %v211
    %222 = vmatprep.subr.bf16.mxu0 0
    %223 = vmatpush1.bf16.msra.mxu0 0
    %224 = vmatprep.subr.bf16.mxu0 0
    %225 = vmatpush1.bf16.msra.mxu0 0
    %226 = vmatprep.subr.bf16.mxu0 0
    %227 = vmatpush1.bf16.msra.mxu0 0
    %228 = vmatprep.subr.bf16.mxu0 0
    %229 = vmatpush1.bf16.msra.mxu0 0
    %230 = vmatprep.subr.bf16.mxu0 0
    %231 = vmatpush1.bf16.msra.mxu0 0
    %232 = vmatprep.subr.bf16.mxu0 0
    %233 = vmatpush1.bf16.msra.mxu0 0
    %234 = vmatprep.subr.bf16.mxu0 0
    %235 = vmatpush1.bf16.msra.mxu0 0
    %236 = vmatprep.subr.bf16.mxu0 0
    %237 = vmatpush1.bf16.msra.mxu0 0
    %238 = vmatprep.subr.bf16.mxu0 0
    %239 = vmatpush1.bf16.msra.mxu0 0
    %240 = vmatprep.subr.bf16.mxu0 0
    %241 = vmatpush1.bf16.msra.mxu0 0
    %242 = vmatprep.subr.bf16.mxu0 0
    %243 = vmatpush1.bf16.msra.mxu0 0
    %244 = vmatprep.subr.bf16.mxu0 0
    %245 = vmatpush1.bf16.msra.mxu0 0
    %246 = vmatprep.subr.bf16.mxu0 0
    %247 = vmatpush1.bf16.msra.mxu0 0
    %248 = vmatprep.subr.bf16.mxu0 0
    %249 = vmatpush1.bf16.msra.mxu0 0
    %250 = vmatprep.mubr.bf16.mxu0 0
    %251 = vmatmul.mubr.bf16.gmra.mrb[0].mxu0 %v216
    %v252 = vpop.f32.mrb[0].mxu0
    %v253 = vadd.f32 0.0, %v252
    %v254 = vpop.f32.mrb[0].mxu0
    %v255 = vpop.f32.mrb[0].mxu0
    %v256 = vpop.f32.mrb[0].mxu0
    %257 = vdwg.mxu0
    %v274 = vunpack.c.l.b16 %v182
    %v275 = vunpack.c.l.b16 %v183
    %v276 = vunpack.c.l.b16 %v184
    %v277 = vunpack.c.l.b16 %v185
    %v278 = vunpack.c.l.b16 %v186
    %v279 = vunpack.c.l.b16 %v187
    %v280 = vunpack.c.l.b16 %v188
    %v281 = vunpack.c.l.b16 %v189
    %v282 = vunpack.c.l.b16 %v190
    %v283 = vunpack.c.l.b16 %v191
    %v284 = vunpack.c.l.b16 %v192
    %v285 = vunpack.c.l.b16 %v193
    %v286 = vunpack.c.l.b16 %v194
    %v287 = vunpack.c.l.b16 %v195
    %v288 = vunpack.c.l.b16 %v196
    %v289 = vunpack.c.l.b16 %v197
    %v290 = vpack.c.b16 %v275, %v274
    %v291 = vpack.c.b16 %v277, %v276
    %v292 = vpack.c.b16 %v279, %v278
    %v293 = vpack.c.b16 %v281, %v280
    %v294 = vpack.c.b16 %v283, %v282
    %v295 = vpack.c.b16 %v285, %v284
    %v296 = vpack.c.b16 %v287, %v286
    %v297 = vpack.c.b16 %v289, %v288
    %306 = vmatprep.subr.bf16.mxu0 0
    %307 = vmatpush1.bf16.msra.mxu0 %v290
    %308 = vmatprep.subr.bf16.mxu0 0
    %309 = vmatpush1.bf16.msra.mxu0 %v291
    %310 = vmatprep.subr.bf16.mxu0 0
    %311 = vmatpush1.bf16.msra.mxu0 %v292
    %312 = vmatprep.subr.bf16.mxu0 0
    %313 = vmatpush1.bf16.msra.mxu0 %v293
    %314 = vmatprep.subr.bf16.mxu0 0
    %315 = vmatpush1.bf16.msra.mxu0 %v294
    %316 = vmatprep.subr.bf16.mxu0 0
    %317 = vmatpush1.bf16.msra.mxu0 %v295
    %318 = vmatprep.subr.bf16.mxu0 0
    %319 = vmatpush1.bf16.msra.mxu0 %v296
    %320 = vmatprep.subr.bf16.mxu0 0
    %321 = vmatpush1.bf16.msra.mxu0 %v297
    %322 = vmatprep.subr.bf16.mxu0 0
    %323 = vmatpush1.bf16.msra.mxu0 0
    %324 = vmatprep.subr.bf16.mxu0 0
    %325 = vmatpush1.bf16.msra.mxu0 0
    %326 = vmatprep.subr.bf16.mxu0 0
    %327 = vmatpush1.bf16.msra.mxu0 0
    %328 = vmatprep.subr.bf16.mxu0 0
    %329 = vmatpush1.bf16.msra.mxu0 0
    %330 = vmatprep.subr.bf16.mxu0 0
    %331 = vmatpush1.bf16.msra.mxu0 0
    %332 = vmatprep.subr.bf16.mxu0 0
    %333 = vmatpush1.bf16.msra.mxu0 0
    %334 = vmatprep.subr.bf16.mxu0 0
    %335 = vmatpush1.bf16.msra.mxu0 0
    %336 = vmatprep.subr.bf16.mxu0 0
    %337 = vmatpush1.bf16.msra.mxu0 0
    %338 = vmatprep.mubr.bf16.mxu0 0
    %339 = vmatmul.mubr.bf16.gmra.mrb[0].mxu0 %v181
    %v340 = vpop.f32.mrb[0].mxu0
    %v341 = vadd.f32 %v253, %v340
    %v342 = vpop.f32.mrb[0].mxu0
    %v343 = vpop.f32.mrb[0].mxu0
    %v344 = vpop.f32.mrb[0].mxu0
    %345 = vdwg.mxu0
    %v346 = vld [vmem:[#allocation5] sm:$0x1]
    %v348 = vlaneseq
    %v349 = vshrl.u32 %v348, 7
    %v350 = vsub.s32 0, %v349
    %v351 = vrot.slane %v346, %v350
    %v353 = vadd.f32 %v341, %v351
    %v354 = vmax.f32 %v353, 0.0
    %v355 = vpack.c.bf16 %v354, %v354
    %v356 = vld [vmem:[#allocation7] sm:$0xf]
    %v357 = vld [vmem:[#allocation7 + $0x4] sm:$0xf]
    %v358 = vld [vmem:[#allocation7 + $0x8] sm:$0xf]
    %v359 = vld [vmem:[#allocation7 + $0xc] sm:$0xf]
    %v360 = vld [vmem:[#allocation7 + $0x10] sm:$0xf]
    %v361 = vld [vmem:[#allocation7 + $0x14] sm:$0xf]
    %v362 = vld [vmem:[#allocation7 + $0x18] sm:$0xf]
    %v363 = vld [vmem:[#allocation7 + $0x1c] sm:$0xf]
    %v364 = vld [vmem:[#allocation7 + $0x20] sm:$0xf]
    %v365 = vld [vmem:[#allocation7 + $0x24] sm:$0xf]
    %v366 = vld [vmem:[#allocation7 + $0x28] sm:$0xf]
    %v367 = vld [vmem:[#allocation7 + $0x2c] sm:$0xf]
    %v368 = vld [vmem:[#allocation7 + $0x30] sm:$0xf]
    %v369 = vld [vmem:[#allocation7 + $0x34] sm:$0xf]
    %v370 = vld [vmem:[#allocation7 + $0x38] sm:$0xf]
    %v371 = vld [vmem:[#allocation7 + $0x3c] sm:$0xf]
    %v372 = vld [vmem:[#allocation8] sm:$0x1]
    %v374 = vlaneseq
    %v375 = vshrl.u32 %v374, 7
    %v376 = vsub.s32 0, %v375
    %v377 = vrot.slane %v372, %v376
    %v395 = vunpack.c.l.b16 %v356
    %v396 = vunpack.c.l.b16 %v357
    %v397 = vunpack.c.l.b16 %v358
    %v398 = vunpack.c.l.b16 %v359
    %v399 = vunpack.c.l.b16 %v360
    %v400 = vunpack.c.l.b16 %v361
    %v401 = vunpack.c.l.b16 %v362
    %v402 = vunpack.c.l.b16 %v363
    %v403 = vunpack.c.l.b16 %v364
    %v404 = vunpack.c.l.b16 %v365
    %v405 = vunpack.c.l.b16 %v366
    %v406 = vunpack.c.l.b16 %v367
    %v407 = vunpack.c.l.b16 %v368
    %v408 = vunpack.c.l.b16 %v369
    %v409 = vunpack.c.l.b16 %v370
    %v410 = vunpack.c.l.b16 %v371
    %v411 = vpack.c.b16 %v396, %v395
    %v412 = vpack.c.b16 %v398, %v397
    %v413 = vpack.c.b16 %v400, %v399
    %v414 = vpack.c.b16 %v402, %v401
    %v415 = vpack.c.b16 %v404, %v403
    %v416 = vpack.c.b16 %v406, %v405
    %v417 = vpack.c.b16 %v408, %v407
    %v418 = vpack.c.b16 %v410, %v409
    %427 = vmatprep.subr.bf16.mxu0 0
    %428 = vmatpush1.bf16.msra.mxu0 %v411
    %429 = vmatprep.subr.bf16.mxu0 0
    %430 = vmatpush1.bf16.msra.mxu0 %v412
    %431 = vmatprep.subr.bf16.mxu0 0
    %432 = vmatpush1.bf16.msra.mxu0 %v413
    %433 = vmatprep.subr.bf16.mxu0 0
    %434 = vmatpush1.bf16.msra.mxu0 %v414
    %435 = vmatprep.subr.bf16.mxu0 0
    %436 = vmatpush1.bf16.msra.mxu0 %v415
    %437 = vmatprep.subr.bf16.mxu0 0
    %438 = vmatpush1.bf16.msra.mxu0 %v416
    %439 = vmatprep.subr.bf16.mxu0 0
    %440 = vmatpush1.bf16.msra.mxu0 %v417
    %441 = vmatprep.subr.bf16.mxu0 0
    %442 = vmatpush1.bf16.msra.mxu0 %v418
    %443 = vmatprep.subr.bf16.mxu0 0
    %444 = vmatpush1.bf16.msra.mxu0 0
    %445 = vmatprep.subr.bf16.mxu0 0
    %446 = vmatpush1.bf16.msra.mxu0 0
    %447 = vmatprep.subr.bf16.mxu0 0
    %448 = vmatpush1.bf16.msra.mxu0 0
    %449 = vmatprep.subr.bf16.mxu0 0
    %450 = vmatpush1.bf16.msra.mxu0 0
    %451 = vmatprep.subr.bf16.mxu0 0
    %452 = vmatpush1.bf16.msra.mxu0 0
    %453 = vmatprep.subr.bf16.mxu0 0
    %454 = vmatpush1.bf16.msra.mxu0 0
    %455 = vmatprep.subr.bf16.mxu0 0
    %456 = vmatpush1.bf16.msra.mxu0 0
    %457 = vmatprep.subr.bf16.mxu0 0
    %458 = vmatpush1.bf16.msra.mxu0 0
    %459 = vmatprep.mubr.bf16.mxu0 0
    %460 = vmatmul.mubr.bf16.gmra.mrb[0].mxu0 %v355
    %v461 = vpop.f32.mrb[0].mxu0
    %v462 = vadd.f32 %v377, %v461
    %v463 = vpop.f32.mrb[0].mxu0
    %v464 = vpop.f32.mrb[0].mxu0
    %v465 = vpop.f32.mrb[0].mxu0
    %466 = vdwg.mxu0
    %467 = vmax.xlane.f32.xlu0 %v462
    %v468 = vpop.xlane.xlu0 %467
    %v469 = vsub.f32 %v462, %v468
    %v470 = vmul.f32 %v469, 1.442695
    %v471 = vpow.pop %v470
    %472 = vadd.xlane.f32.xlu0 %v471
    %v473 = vpop.xlane.xlu0 %472
    %v474 = vlog2.pop %v473
    %v475 = vmul.f32 %v474, 0.6931472
    %v476 = vsub.f32 %v469, %v475
    %477 = vmax.xlane.f32.xlu0 %v176
    %v478 = vpop.xlane.xlu0 %477
    %v479 = vsub.f32 %v176, %v478
    %v480 = vmul.f32 %v479, 1.442695
    %v481 = vpow.pop %v480
    %482 = vadd.xlane.f32.xlu0 %v481
    %v483 = vpop.xlane.xlu0 %482
    %v484 = vlog2.pop %v483
    %v485 = vmul.f32 %v484, 0.6931472
    %v486 = vsub.f32 %v479, %v485
    %v487 = vadd.f32 %v476, %v486
    %v488 = vld [vmem:[%s9] sm:$0x1]
    %v490 = vlaneseq
    %v491 = vshrl.u32 %v490, 7
    %v492 = vsub.s32 0, %v491
    %v493 = vrot.slane %v488, %v492
    %v495 = vmul.f32 %v487, %v493
    %v496 = vld [vmem:[#allocation10] sm:$0x1]
    %v498 = vlaneseq
    %v499 = vshrl.u32 %v498, 7
    %v500 = vsub.s32 0, %v499
    %v501 = vrot.slane %v496, %v500
    %v503 = vadd.f32 %v495, %v501
    %vm504 = vcmask 64512
    %505 = vst.msk [vmem:[#allocation11] sm:$0xff] %vm504, %v503
    // Predicated region
    $region66: #{gpa_head_forward.1} parent=1 // pred_check
      _
    $region67: #{gpa_head_forward.1} parent=1 // pred_check_branch
      %507 = sbr.rel (0) target = $region69
    $region68: #{gpa_head_forward.1} parent=1 // pred_region
      %s509 = ssub.s32 128, 128
      %510 = vsyncadd [#allocation4], %s509
      %s512 = sshll.u32 [#allocation11], 4
      %s513 = int_to_ptr.vmem [resolvable:$true] %s512
      %515 = dma.vmem_to_hbm [thread:$0]  %s513, 128, %s11, [#allocation4]
    $region69: #{gpa_head_forward.1} parent=1 // pred_fallthru
      _
    // Predicated region
    $region70: #{gpa_head_forward.1} parent=1 // pred_check
      _
    $region71: #{gpa_head_forward.1} parent=1 // pred_check_branch
      %517 = sbr.rel (0) target = $region73
    $region72: #{gpa_head_forward.1} parent=1 // pred_region
      %518 = dma.done [#allocation4], 128
    $region73: #{gpa_head_forward.1} parent=1 // pred_fallthru
      _
    %519 = vsyncpa [#allocation3], 1
    %520 = vsyncpa [#allocation6], 1
    %521 = vsyncpa [#allocation9], 1
    %522 = vsyncpa [#allocation4], 1

</llo_original>
